<compile_context>
chip_gen: v7x
topology: tpu7x:2x2x1
jax: 0.10.0
libtpu: 0.0.40
codegen_flags: <defaults>
</compile_context>

<pallas_src>
import jax
import jax.numpy as jnp
from jax.experimental import pallas as pl
from jax.experimental.pallas import tpu as pltpu


# ---------------------------------------------------------------------------
# Kernels
# ---------------------------------------------------------------------------

def conv1x1_bn_silu_kernel(x_ref, w_ref, b_ref, o_ref):
    """x_ref: (Cin, L)   w_ref: (C2, Cin)   b_ref: (C2, 1)   o_ref: (C2, L)."""
    z = jnp.dot(w_ref[...], x_ref[...].astype(jnp.float32),
                preferred_element_type=jnp.float32)
    z = z + b_ref[...]
    z = z * jax.nn.sigmoid(z)                       # SiLU
    o_ref[...] = z.astype(o_ref.dtype)


def make_conv3x3_kernel(H, W, add_residual):
    """3x3 conv (pad=1) + bias + SiLU (+ optional residual) on a flattened, padded map."""
    Wp = W + 2            # padded width (1 left + 1 right)
    M = H * Wp            # flat output length (padded-width row layout)

    def kernel(xp_ref, w_ref, b_ref, *rest):
        # xp_ref: (Cin, (H+3)*Wp)   w_ref: (9, C2, Cin)   b_ref: (C2, 1)
        # rest = (res_ref, o_ref) or (o_ref,)
        if add_residual:
            res_ref, o_ref = rest
        else:
            (o_ref,) = rest

        xp = xp_ref[...].astype(jnp.float32)
        acc = None
        for dy in range(3):
            for dx in range(3):
                off = dy * Wp + dx                  # static lane offset of this tap
                tap = xp[:, off:off + M]            # (Cin, M) contiguous lane slice
                part = jnp.dot(w_ref[3 * dy + dx], tap,
                               preferred_element_type=jnp.float32)
                acc = part if acc is None else acc + part

        z = acc + b_ref[...]
        z = z * jax.nn.sigmoid(z)                   # SiLU
        if add_residual:
            z = z + res_ref[...].astype(jnp.float32)
        o_ref[...] = z.astype(o_ref.dtype)

    return kernel


# ---------------------------------------------------------------------------
# Wrappers
# ---------------------------------------------------------------------------

def conv1x1_bn_silu(x, w2d, b):
    """x: (B, Cin, H, W); w2d: (C2, Cin); b: (C2,) -> (B, C2, H, W)."""
    B, Cin, H, W = x.shape
    C2 = w2d.shape[0]
    L = H * W
    x_flat = x.reshape(B, Cin, L)
    out = pl.pallas_call(
        conv1x1_bn_silu_kernel,
        out_shape=jax.ShapeDtypeStruct((B, C2, L), x.dtype),
        grid=(B,),
        in_specs=[
            pl.BlockSpec((None, Cin, L), lambda bi: (bi, 0, 0)),
            pl.BlockSpec((C2, Cin), lambda bi: (0, 0)),
            pl.BlockSpec((C2, 1), lambda bi: (0, 0)),
        ],
        out_specs=pl.BlockSpec((None, C2, L), lambda bi: (bi, 0, 0)),
        compiler_params=pltpu.CompilerParams(dimension_semantics=("parallel",)),
    )(x_flat, w2d.astype(jnp.float32), b.reshape(C2, 1).astype(jnp.float32))
    return out.reshape(B, C2, H, W)


def conv3x3_bn_silu(x, w9, b, residual=None):
    """x: (B, C, H, W); w9: (9, C2, C) [tap index = 3*dy+dx]; b: (C2,).

    residual: optional (B, C2, H, W) added after the activation (fused in-kernel).
    """
    B, C, H, W = x.shape
    C2 = w9.shape[1]
    Wp, Hp = W + 2, H + 3                 # pad: 1 left/right, 1 top, 2 bottom (slack for flat taps)
    M = H * Wp

    xp = jnp.pad(x, ((0, 0), (0, 0), (1, 2), (1, 1))).reshape(B, C, Hp * Wp)

    args = [xp, w9.astype(jnp.float32), b.reshape(C2, 1).astype(jnp.float32)]
    in_specs = [
        pl.BlockSpec((None, C, Hp * Wp), lambda bi: (bi, 0, 0)),
        pl.BlockSpec((9, C2, C), lambda bi: (0, 0, 0)),
        pl.BlockSpec((C2, 1), lambda bi: (0, 0)),
    ]
    add_res = residual is not None
    if add_res:
        res = jnp.pad(residual, ((0, 0), (0, 0), (0, 0), (0, Wp - W))).reshape(B, C2, M)
        args.append(res)
        in_specs.append(pl.BlockSpec((None, C2, M), lambda bi: (bi, 0, 0)))

    out = pl.pallas_call(
        make_conv3x3_kernel(H, W, add_res),
        out_shape=jax.ShapeDtypeStruct((B, C2, M), x.dtype),
        grid=(B,),
        in_specs=in_specs,
        out_specs=pl.BlockSpec((None, C2, M), lambda bi: (bi, 0, 0)),
        compiler_params=pltpu.CompilerParams(dimension_semantics=("parallel",)),
    )(*args)
    # Drop the 2 garbage columns per row that come from the padded-width layout.
    return out.reshape(B, C2, H, Wp)[:, :, :, :W]


def c1_forward(x, params):
    """C1.forward: y = cv1(x); return m(y) + y.

    params: {"w1": (C2,Cin), "b1": (C2,), "w3": [(9,C2,C2)]*n, "b3": [(C2,)]*n}
    (BatchNorm already folded into weights/biases.)
    """
    y = conv1x1_bn_silu(x, params["w1"], params["b1"])
    n = len(params["w3"])
    if n == 0:
        return y + y
    z = y
    for i in range(n):
        res = y if i == n - 1 else None
        z = conv3x3_bn_silu(z, params["w3"][i], params["b3"][i], residual=res)
    return z


# ---------------------------------------------------------------------------
# Pure-JAX reference & parameter helpers
# ---------------------------------------------------------------------------

def fold_bn(w4d, gamma, beta, mean, var, eps=1e-3):
    """Fold BatchNorm2d (inference) into a bias-free conv: returns (w_folded, bias)."""
    scale = gamma / jnp.sqrt(var + eps)
    return w4d * scale[:, None, None, None], beta - mean * scale


def _conv_bn_silu_ref(x, w4d, b):
    y = jax.lax.conv_general_dilated(
        x, w4d, window_strides=(1, 1), padding="SAME",
        dimension_numbers=("NCHW", "OIHW", "NCHW"),
        precision=jax.lax.Precision.HIGHEST)
    y = y + b[None, :, None, None]
    return y * jax.nn.sigmoid(y)


def c1_reference(x, w1_4d, b1, w3_4d_list, b3_list):
    y = _conv_bn_silu_ref(x, w1_4d, b1)
    z = y
    for w3, b3 in zip(w3_4d_list, b3_list):
        z = _conv_bn_silu_ref(z, w3, b3)
    return z + y


# ---------------------------------------------------------------------------
# Demo / self-test
# ---------------------------------------------------------------------------

if __name__ == "__main__":
    B, C_IN, C_OUT, H, W, N = 2, 16, 32, 16, 16, 2   # C1(c1=16, c2=32, n=2)

    keys = iter(jax.random.split(jax.random.PRNGKey(0), 16))
    x = jax.random.normal(next(keys), (B, C_IN, H, W), dtype=jnp.float32)

    def make_bn(c):
        return (1.0 + 0.1 * jax.random.normal(next(keys), (c,), jnp.float32),   # gamma
                0.1 * jax.random.normal(next(keys), (c,), jnp.float32),         # beta
                0.1 * jax.random.normal(next(keys), (c,), jnp.float32),         # running mean
                jax.random.uniform(next(keys), (c,), jnp.float32, 0.5, 1.5))    # running var

    w1 = jax.random.normal(next(keys), (C_OUT, C_IN, 1, 1), jnp.float32) / jnp.sqrt(C_IN)
    bn1 = make_bn(C_OUT)
    w1_f, b1 = fold_bn(w1, *bn1)

    w3_f_list, b3_list = [], []
    for _ in range(N):
        w3 = jax.random.normal(next(keys), (C_OUT, C_OUT, 3, 3), jnp.float32) / jnp.sqrt(9 * C_OUT)
        bn3 = make_bn(C_OUT)
        w3_f, b3 = fold_bn(w3, *bn3)
        w3_f_list.append(w3_f)
        b3_list.append(b3)

    params = {
        "w1": w1_f[:, :, 0, 0],                                            # (C2, Cin)
        "b1": b1,
        "w3": [w.transpose(2, 3, 0, 1).reshape(9, C_OUT, C_OUT) for w in w3_f_list],
        "b3": b3_list,
    }

    out = jax.block_until_ready(c1_forward(x, params))
    ref = c1_reference(x, w1_f, b1, w3_f_list, b3_list)

    assert out.shape == (B, C_OUT, H, W)
    # Tolerance accounts for MXU default-precision f32 matmul passes vs the
    # HIGHEST-precision XLA convolution used as ground truth.
    assert jnp.allclose(out, ref, atol=2e-2, rtol=2e-2), float(jnp.max(jnp.abs(out - ref)))
    print("KERNEL_OK")
</pallas_src>

<mosaic_0001>
module attributes {stable_mosaic.version = 11 : i64} {
  func.func @conv1x1_bn_silu_kernel(%arg0: i32, %arg1: memref<1x16x256xf32, #tpu.memory_space<vmem>>, %arg2: memref<32x16xf32, #tpu.memory_space<vmem>>, %arg3: memref<32x1xf32, #tpu.memory_space<vmem>>, %arg4: memref<1x32x256xf32, #tpu.memory_space<vmem>>) attributes {dimension_semantics = [#tpu.dimension_semantics<parallel>], iteration_bounds = array<i64: 2>, scalar_prefetch = 0 : i64, scratch_operands = 0 : i64, tpu.core_type = #tpu.core_type<tc>, window_params = [{transform_indices = @transform_0, window_bounds = array<i64: 1, 16, 256>}, {pipeline_mode = #tpu.pipeline_mode<synchronous>, transform_indices = @transform_1, window_bounds = array<i64: 32, 16>}, {pipeline_mode = #tpu.pipeline_mode<synchronous>, transform_indices = @transform_2, window_bounds = array<i64: 32, 1>}, {transform_indices = @transform_3, window_bounds = array<i64: 1, 32, 256>}]} {
    %c0 = arith.constant 0 : index
    %c0_0 = arith.constant 0 : index
    %0 = vector.load %arg2[%c0, %c0_0] : memref<32x16xf32, #tpu.memory_space<vmem>>, vector<32x16xf32>
    %c0_1 = arith.constant 0 : index
    %c0_2 = arith.constant 0 : index
    %c0_3 = arith.constant 0 : index
    %1 = vector.load %arg1[%c0_1, %c0_2, %c0_3] : memref<1x16x256xf32, #tpu.memory_space<vmem>>, vector<1x16x256xf32>
    %2 = vector.shape_cast %1 : vector<1x16x256xf32> to vector<16x256xf32>
    %cst = arith.constant dense<0.000000e+00> : vector<32x256xf32>
    %3 = tpu.matmul %0, %2, %cst {dimension_numbers = #tpu.dot_dimension_numbers<[1], [0], [0], [1], [0, 0, 1, 1], [], []>} : vector<32x16xf32>, vector<16x256xf32>, vector<32x256xf32> -> vector<32x256xf32>
    %c0_4 = arith.constant 0 : index
    %c0_5 = arith.constant 0 : index
    %4 = vector.load %arg3[%c0_4, %c0_5] : memref<32x1xf32, #tpu.memory_space<vmem>>, vector<32x1xf32>
    %5 = vector.broadcast %4 : vector<32x1xf32> to vector<32x256xf32>
    %6 = arith.addf %3, %5 : vector<32x256xf32>
    %7 = arith.negf %6 : vector<32x256xf32>
    %8 = math.exp %7 : vector<32x256xf32>
    %cst_6 = arith.constant 1.000000e+00 : f32
    %9 = vector.broadcast %cst_6 : f32 to vector<32x256xf32>
    %10 = arith.addf %9, %8 : vector<32x256xf32>
    %11 = arith.divf %9, %10 : vector<32x256xf32>
    %12 = arith.mulf %6, %11 : vector<32x256xf32>
    %c0_7 = arith.constant 0 : index
    %c0_8 = arith.constant 0 : index
    %c0_9 = arith.constant 0 : index
    %13 = vector.load %arg4[%c0_7, %c0_8, %c0_9] : memref<1x32x256xf32, #tpu.memory_space<vmem>>, vector<1x32x256xf32>
    %14 = vector.shape_cast %13 : vector<1x32x256xf32> to vector<32x256xf32>
    %15 = vector.shape_cast %12 : vector<32x256xf32> to vector<1x32x256xf32>
    tpu.vector_store %arg4[%c0_7, %c0_8, %c0_9], %15 {strides = array<i32>} : memref<1x32x256xf32, #tpu.memory_space<vmem>>, vector<1x32x256xf32>,
    return
  }
  func.func @transform_0(%arg0: i32) -> (i32, i32, i32) {
    %c0_i32 = arith.constant 0 : i32
    %c0_i32_0 = arith.constant 0 : i32
    %c0_i32_1 = arith.constant 0 : i32
    return %arg0, %c0_i32, %c0_i32_0 : i32, i32, i32
  }
  func.func @transform_1(%arg0: i32) -> (i32, i32) {
    %c0_i32 = arith.constant 0 : i32
    %c0_i32_0 = arith.constant 0 : i32
    %c0_i32_1 = arith.constant 0 : i32
    return %c0_i32, %c0_i32_0 : i32, i32
  }
  func.func @transform_2(%arg0: i32) -> (i32, i32) {
    %c0_i32 = arith.constant 0 : i32
    %c0_i32_0 = arith.constant 0 : i32
    %c0_i32_1 = arith.constant 0 : i32
    return %c0_i32, %c0_i32_0 : i32, i32
  }
  func.func @transform_3(%arg0: i32) -> (i32, i32, i32) {
    %c0_i32 = arith.constant 0 : i32
    %c0_i32_0 = arith.constant 0 : i32
    %c0_i32_1 = arith.constant 0 : i32
    return %arg0, %c0_i32, %c0_i32_0 : i32, i32, i32
  }
}

</mosaic_0001>

<llo_original>
// kernel: tpu_custom_call.1
$region0: #{tpu_custom_call.1}
  #allocation0 [shape = 'u32[]', space=smem, size = 0x4, offset = 0x4, fixed_abs, tag = 'smem constant byte address 0x4 - core index']
  #allocation1 [shape = 'u32[144,128]{1,0:T(1,128)}', space=vmem, size = 0x12000, scoped, tag = 'internal scratch']
  %s0 = inlined_call_operand.vmem [shape: f32[2,16,256], index: 0, kind: input, shape index: {}]
  %s1 = inlined_call_operand.vmem [shape: f32[32,16], index: 1, kind: input, shape index: {}]
  %s2 = inlined_call_operand.vmem [shape: f32[32,1], index: 2, kind: input, shape index: {}]
  %s3 = inlined_call_operand.hbm [shape: f32[2,32,256], index: 3, kind: output, shape index: {}]
  %s4 = sld [smem:[#allocation0]]
  $region45: #{tpu_custom_call.1} parent=0
    _
  %s6 = ssub.s32 1, %s4
  %s7 = scalar_select 0, %s6, %s4
  $region1: #{tpu_custom_call.1} parent=0
    #allocation2 [shape = 'u8[65536]{0}', space=vmem, size = 0x10000, scoped, tag = 'output window, operand 0']
    #allocation3 [shape = 's32[2]{0}', space=sflag, size = 0x8, scoped, tag = 'scoped memory for tpu_custom_call.1']
    %8 = vsyncpa [#allocation3], 0
    %s9 = scalar_lea.sflag [#allocation3], 1
    %10 = vsyncpa %s9, 0
    loop: start=0, step=1, limit=4
    $region2: #{tpu_custom_call.1} parent=1 // loop_pre_header
      _
    $region3: #{tpu_custom_call.1} parent=1 // loop_header
      %s12 = sphi 0, %s16
      %p13 = scmp.ge.s32.totalorder %s12, 4
      %s22 = sphi 0, %s24
      %s25 = sphi 0, %s22
      %s26 = sphi 0, %s25
      %s42 = sphi 0, %s26
      %s46 = sphi 0, %s46
      %s48 = sphi 0, %s46
      %s49 = sphi 0, %s48
      %s63 = sphi 0, %s49
      %s67 = sphi 0, %s67
      %s69 = sphi 0, %s67
      %s70 = sphi 0, %s69
      %s84 = sphi 0, %s70
      %s90 = sphi 0, %s92
      %s93 = sphi 0, %s90
      %s94 = sphi 0, %s93
      %s110 = sphi 0, %s94
    $region4: #{tpu_custom_call.1} parent=1 // loop_header_branch
      %15 = sbr.rel (%p13) target = $region8
    $region5: #{tpu_custom_call.1} parent=1 // loop_body
      %s17 = ssub.s32 %s12, 1
      %s18 = ssub.s32 %s12, 2
      %s19 = sadd.s32 %s12, 1
      %s20 = ssub.s32 %s12, %s19
      %p21 = scmp.eq.s32.totalorder %s20, 0
      %s23 = sadd.s32 %s22, 1
      %s24 = scalar_select %p21, %s22, %s23
      %p27 = pneg %p21
      %p28 = scmp.eq.s32.totalorder %s12, 1
      %p29 = por %p27, %p28
      %p30 = scmp.ne.s32.totalorder %s22, %s25
      %p31 = scmp.eq.s32.totalorder %s12, 0
      %p32 = por %p30, %p31
      %p33 = scmp.ne.s32.totalorder %s22, %s25
      %p34 = scmp.eq.s32.totalorder %s17, 1
      %p35 = por %p33, %p34
      %p36 = scmp.ne.s32.totalorder %s25, %s26
      %p37 = scmp.eq.s32.totalorder %s17, 0
      %p38 = por %p36, %p37
      %p39 = scmp.ne.s32.totalorder %s25, %s26
      %p40 = scmp.eq.s32.totalorder %s18, 1
      %p41 = por %p39, %p40
      %p43 = scmp.ne.s32.totalorder %s26, %s42
      %p44 = scmp.eq.s32.totalorder %s18, 0
      %p45 = por %p43, %p44
      %s47 = sadd.s32 %s46, 1
      %p50 = scmp.eq.s32.totalorder %s12, 1
      %p51 = scmp.ne.s32.totalorder %s46, %s48
      %p52 = scmp.eq.s32.totalorder %s12, 0
      %p53 = por %p51, %p52
      %p54 = scmp.ne.s32.totalorder %s46, %s48
      %p55 = scmp.eq.s32.totalorder %s17, 1
      %p56 = por %p54, %p55
      %p57 = scmp.ne.s32.totalorder %s48, %s49
      %p58 = scmp.eq.s32.totalorder %s17, 0
      %p59 = por %p57, %p58
      %p60 = scmp.ne.s32.totalorder %s48, %s49
      %p61 = scmp.eq.s32.totalorder %s18, 1
      %p62 = por %p60, %p61
      %p64 = scmp.ne.s32.totalorder %s49, %s63
      %p65 = scmp.eq.s32.totalorder %s18, 0
      %p66 = por %p64, %p65
      %s68 = sadd.s32 %s67, 1
      %p71 = scmp.eq.s32.totalorder %s12, 1
      %p72 = scmp.ne.s32.totalorder %s67, %s69
      %p73 = scmp.eq.s32.totalorder %s12, 0
      %p74 = por %p72, %p73
      %p75 = scmp.ne.s32.totalorder %s67, %s69
      %p76 = scmp.eq.s32.totalorder %s17, 1
      %p77 = por %p75, %p76
      %p78 = scmp.ne.s32.totalorder %s69, %s70
      %p79 = scmp.eq.s32.totalorder %s17, 0
      %p80 = por %p78, %p79
      %p81 = scmp.ne.s32.totalorder %s69, %s70
      %p82 = scmp.eq.s32.totalorder %s18, 1
      %p83 = por %p81, %p82
      %p85 = scmp.ne.s32.totalorder %s70, %s84
      %p86 = scmp.eq.s32.totalorder %s18, 0
      %p87 = por %p85, %p86
      %s88 = ssub.s32 %s12, %s19
      %p89 = scmp.eq.s32.totalorder %s88, 0
      %s91 = sadd.s32 %s90, 1
      %s92 = scalar_select %p89, %s90, %s91
      %p95 = pneg %p89
      %p96 = scmp.eq.s32.totalorder %s12, 1
      %p97 = por %p95, %p96
      %p98 = scmp.ne.s32.totalorder %s90, %s93
      %p99 = scmp.eq.s32.totalorder %s12, 0
      %p100 = por %p98, %p99
      %p101 = scmp.ne.s32.totalorder %s90, %s93
      %p102 = scmp.eq.s32.totalorder %s17, 1
      %p103 = por %p101, %p102
      %p104 = scmp.ne.s32.totalorder %s93, %s94
      %p105 = scmp.eq.s32.totalorder %s17, 0
      %p106 = por %p104, %p105
      %p107 = scmp.ne.s32.totalorder %s93, %s94
      %p108 = scmp.eq.s32.totalorder %s18, 1
      %p109 = por %p107, %p108
      %p111 = scmp.ne.s32.totalorder %s94, %s110
      %p112 = scmp.eq.s32.totalorder %s18, 0
      %p113 = por %p111, %p112
      %p114 = scmp.le.s32.totalorder 1, %s12
      %p115 = scmp.lt.s32.totalorder %s12, 3
      %p116 = pnand %p114, %p115
      %p117 = pneg %p116
      // Predicated region
      $region9: #{tpu_custom_call.1} parent=5 // pred_check
        _
      $region10: #{tpu_custom_call.1} parent=5 // pred_check_branch
        %119 = sbr.rel (%p116) target = $region12
      $region11: #{tpu_custom_call.1} parent=5 // pred_region
        %s120 = ssub.s32 %s12, 1
        // Predicated region
        $region13: #{tpu_custom_call.1} parent=11 // pred_check
          %p121 = pneg %p59
        $region14: #{tpu_custom_call.1} parent=11 // pred_check_branch
          %123 = sbr.rel (%p121) target = $region16
        $region15: #{tpu_custom_call.1} parent=11 // pred_region
          _
        $region16: #{tpu_custom_call.1} parent=11 // pred_fallthru
          _
        // Predicated region
        $region17: #{tpu_custom_call.1} parent=11 // pred_check
          %p124 = pneg %p80
        $region18: #{tpu_custom_call.1} parent=11 // pred_check_branch
          %126 = sbr.rel (%p124) target = $region20
        $region19: #{tpu_custom_call.1} parent=11 // pred_region
          _
        $region20: #{tpu_custom_call.1} parent=11 // pred_fallthru
          _
      $region12: #{tpu_custom_call.1} parent=5 // pred_fallthru
        _
      %p127 = scmp.lt.s32.totalorder %s12, 2
      // Predicated region
      $region21: #{tpu_custom_call.1} parent=5 // pred_check
        %p128 = pneg %p127
      $region22: #{tpu_custom_call.1} parent=5 // pred_check_branch
        %130 = sbr.rel (%p128) target = $region24
      $region23: #{tpu_custom_call.1} parent=5 // pred_region
        // Predicated region
        $region25: #{tpu_custom_call.1} parent=23 // pred_check
          %p131 = pneg %p32
        $region26: #{tpu_custom_call.1} parent=23 // pred_check_branch
          %133 = sbr.rel (%p131) target = $region28
        $region27: #{tpu_custom_call.1} parent=23 // pred_region
          %p134 = scmp.lt.s32.totalorder %s12, 1
          %s135 = scalar_select %p134, %s12, 1
          %s136 = smul.addr %s135, 4
          %s137 = smul.addr %s136, 8
          %s138 = scalar_lea.vmem %s0, %s137
        $region28: #{tpu_custom_call.1} parent=23 // pred_fallthru
          _
      $region24: #{tpu_custom_call.1} parent=5 // pred_fallthru
        _
      %p139 = scmp.le.s32.totalorder 1, %s12
      %p140 = scmp.lt.s32.totalorder %s12, 3
      %p141 = pnand %p139, %p140
      %p142 = pneg %p141
      // Predicated region
      $region29: #{tpu_custom_call.1} parent=5 // pred_check
        _
      $region30: #{tpu_custom_call.1} parent=5 // pred_check_branch
        %144 = sbr.rel (%p141) target = $region32
      $region31: #{tpu_custom_call.1} parent=5 // pred_region
        %s145 = ssub.s32 %s12, 1
        %p146 = scmp.lt.s32.totalorder %s17, 1
        %s147 = scalar_select %p146, %s17, 1
        %s148 = smul.addr %s147, 4
        %s149 = smul.addr %s148, 8
        %s150 = scalar_lea.vmem %s0, %s149
        %p151 = pneg %p38
        %p152 = pneg %p35
        %p153 = pneg %p59
        %p154 = pneg %p56
        %p155 = pneg %p80
        %p156 = pneg %p77
        %p157 = pneg %p106
        %p158 = pneg %p103
        %s159 = sand.u32 %s93, 1
        %s160 = scalar_lea.sflag [#allocation3], %s159
        %s161 = sand.u32 %s93, 1
        %s162 = smul.addr %s161, 64
        %s163 = scalar_lea.vmem [#allocation2], %s162
        %p164 = scmp.lt.s32.totalorder %s17, 1
        %s165 = scalar_select %p164, %s17, 1
        %s166 = smul.addr %s165, 4
        %s167 = smul.addr %s166, 8
        %s168 = scalar_lea.vmem %s0, %s167
        %v169 = vld [vmem:[%s1] sm:$0xff]
        %v170 = vld [vmem:[%s1 + $0x8] sm:$0xff]
        %v171 = vld [vmem:[%s1 + $0x10] sm:$0xff]
        %v172 = vld [vmem:[%s1 + $0x18] sm:$0xff]
        %v173 = vld [vmem:[%s168] sm:$0xff]
        %v174 = vld [vmem:[%s168 + $0x8] sm:$0xff]
        %v175 = vld [vmem:[%s168 + $0x10] sm:$0xff]
        %v176 = vld [vmem:[%s168 + $0x18] sm:$0xff]
        %v177 = vld [vmem:[%s2] sm:$0xff]
        %v178 = vld [vmem:[%s2 + $0x8] sm:$0xff]
        %v179 = vld [vmem:[%s2 + $0x10] sm:$0xff]
        %v180 = vld [vmem:[%s2 + $0x18] sm:$0xff]
        %182 = vset.pattern.permute.xlu0 0
        %183 = vperm.xlu0 %182, %v177
        %v184 = vpop.permute.xlu0 %183
        %187 = vset.pattern.permute.xlu0 0
        %188 = vperm.xlu0 %187, %v178
        %v189 = vpop.permute.xlu0 %188
        %192 = vset.pattern.permute.xlu0 0
        %193 = vperm.xlu0 %192, %v179
        %v194 = vpop.permute.xlu0 %193
        %197 = vset.pattern.permute.xlu0 0
        %198 = vperm.xlu0 %197, %v180
        %v199 = vpop.permute.xlu0 %198
        %vm201 = vcmask 130048
        %v203 = vsel %vm201, %v169, 0
        %v206 = vsel %vm201, %v170, 0
        %v209 = vsel %vm201, %v171, 0
        %v212 = vsel %vm201, %v172, 0
        %214 = vmatprep.subr.mxu0 %v174
        %215 = vmatpush1.msra.mxu0 %v173
        %216 = vmatprep.subr.mxu0 %v176
        %217 = vmatpush1.msra.mxu0 %v175
        %218 = vmatprep.subr.mxu0 0.0
        %219 = vmatpush1.msra.mxu0 0.0
        %220 = vmatprep.subr.mxu0 0.0
        %221 = vmatpush1.msra.mxu0 0.0
        %222 = vmatprep.subr.mxu0 0.0
        %223 = vmatpush1.msra.mxu0 0.0
        %224 = vmatprep.subr.mxu0 0.0
        %225 = vmatpush1.msra.mxu0 0.0
        %226 = vmatprep.subr.mxu0 0.0
        %227 = vmatpush1.msra.mxu0 0.0
        %228 = vmatprep.subr.mxu0 0.0
        %229 = vmatpush1.msra.mxu0 0.0
        %230 = vmatprep.subr.mxu0 0.0
        %231 = vmatpush1.msra.mxu0 0.0
        %232 = vmatprep.subr.mxu0 0.0
        %233 = vmatpush1.msra.mxu0 0.0
        %234 = vmatprep.subr.mxu0 0.0
        %235 = vmatpush1.msra.mxu0 0.0
        %236 = vmatprep.subr.mxu0 0.0
        %237 = vmatpush1.msra.mxu0 0.0
        %238 = vmatprep.subr.mxu0 0.0
        %239 = vmatpush1.msra.mxu0 0.0
        %240 = vmatprep.subr.mxu0 0.0
        %241 = vmatpush1.msra.mxu0 0.0
        %242 = vmatprep.subr.mxu0 0.0
        %243 = vmatpush1.msra.mxu0 0.0
        %244 = vmatprep.subr.mxu0 0.0
        %245 = vmatpush1.msra.mxu0 0.0
        %246 = vmatprep.subr.mxu0 0.0
        %247 = vmatpush1.msra.mxu0 0.0
        %248 = vmatprep.subr.mxu0 0.0
        %249 = vmatpush1.msra.mxu0 0.0
        %250 = vmatprep.subr.mxu0 0.0
        %251 = vmatpush1.msra.mxu0 0.0
        %252 = vmatprep.subr.mxu0 0.0
        %253 = vmatpush1.msra.mxu0 0.0
        %254 = vmatprep.subr.mxu0 0.0
        %255 = vmatpush1.msra.mxu0 0.0
        %256 = vmatprep.subr.mxu0 0.0
        %257 = vmatpush1.msra.mxu0 0.0
        %258 = vmatprep.subr.mxu0 0.0
        %259 = vmatpush1.msra.mxu0 0.0
        %260 = vmatprep.subr.mxu0 0.0
        %261 = vmatpush1.msra.mxu0 0.0
        %262 = vmatprep.subr.mxu0 0.0
        %263 = vmatpush1.msra.mxu0 0.0
        %264 = vmatprep.subr.mxu0 0.0
        %265 = vmatpush1.msra.mxu0 0.0
        %266 = vmatprep.subr.mxu0 0.0
        %267 = vmatpush1.msra.mxu0 0.0
        %268 = vmatprep.subr.mxu0 0.0
        %269 = vmatpush1.msra.mxu0 0.0
        %270 = vmatprep.subr.mxu0 0.0
        %271 = vmatpush1.msra.mxu0 0.0
        %272 = vmatprep.subr.mxu0 0.0
        %273 = vmatpush1.msra.mxu0 0.0
        %274 = vmatprep.subr.mxu0 0.0
        %275 = vmatpush1.msra.mxu0 0.0
        %276 = vmatprep.subr.mxu0 0.0
        %277 = vmatpush1.msra.mxu0 0.0
        %278 = vmatprep.mubr.f32.mxu0 0.0
        %279 = vmatmul.mubr.f32.gmra.mrb[0].mxu0 %v203
        %v280 = vpop.f32.mrb[0].mxu0
        %v281 = vadd.f32 %v184, %v280
        %v282 = vpop.f32.mrb[0].mxu0
        %v283 = vadd.f32 %v184, %v282
        %284 = vmatprep.mubr.f32.mxu0 0.0
        %285 = vmatmul.mubr.f32.gmra.mrb[0].mxu0 %v206
        %v286 = vpop.f32.mrb[0].mxu0
        %v287 = vadd.f32 %v189, %v286
        %v288 = vpop.f32.mrb[0].mxu0
        %v289 = vadd.f32 %v189, %v288
        %290 = vmatprep.mubr.f32.mxu0 0.0
        %291 = vmatmul.mubr.f32.gmra.mrb[0].mxu0 %v209
        %v292 = vpop.f32.mrb[0].mxu0
        %v293 = vadd.f32 %v194, %v292
        %v294 = vpop.f32.mrb[0].mxu0
        %v295 = vadd.f32 %v194, %v294
        %296 = vmatprep.mubr.f32.mxu0 0.0
        %297 = vmatmul.mubr.f32.gmra.mrb[0].mxu0 %v212
        %v298 = vpop.f32.mrb[0].mxu0
        %v299 = vadd.f32 %v199, %v298
        %v300 = vpop.f32.mrb[0].mxu0
        %v301 = vadd.f32 %v199, %v300
        %302 = vdwg.mxu0
        %v303 = vxor.u32 %v281, 2147483648
        %v304 = vxor.u32 %v283, 2147483648
        %v305 = vxor.u32 %v287, 2147483648
        %v306 = vxor.u32 %v289, 2147483648
        %v307 = vxor.u32 %v293, 2147483648
        %v308 = vxor.u32 %v295, 2147483648
        %v309 = vxor.u32 %v299, 2147483648
        %v310 = vxor.u32 %v301, 2147483648
        %v311 = vmul.f32 %v303, 1.442695
        %v312 = vpow.pop %v311
        %v313 = vmul.f32 %v304, 1.442695
        %v314 = vpow.pop %v313
        %v315 = vmul.f32 %v305, 1.442695
        %v316 = vpow.pop %v315
        %v317 = vmul.f32 %v306, 1.442695
        %v318 = vpow.pop %v317
        %v319 = vmul.f32 %v307, 1.442695
        %v320 = vpow.pop %v319
        %v321 = vmul.f32 %v308, 1.442695
        %v322 = vpow.pop %v321
        %v323 = vmul.f32 %v309, 1.442695
        %v324 = vpow.pop %v323
        %v325 = vmul.f32 %v310, 1.442695
        %v326 = vpow.pop %v325
        %v327 = vadd.f32 %v312, 1.0
        %v328 = vadd.f32 %v314, 1.0
        %v329 = vadd.f32 %v316, 1.0
        %v330 = vadd.f32 %v318, 1.0
        %v331 = vadd.f32 %v320, 1.0
        %v332 = vadd.f32 %v322, 1.0
        %v333 = vadd.f32 %v324, 1.0
        %v334 = vadd.f32 %v326, 1.0
        %v335 = vrcp.pop %v327
        %v336 = vmul.f32 1.0, %v335
        %v337 = vrcp.pop %v328
        %v338 = vmul.f32 1.0, %v337
        %v339 = vrcp.pop %v329
        %v340 = vmul.f32 1.0, %v339
        %v341 = vrcp.pop %v330
        %v342 = vmul.f32 1.0, %v341
        %v343 = vrcp.pop %v331
        %v344 = vmul.f32 1.0, %v343
        %v345 = vrcp.pop %v332
        %v346 = vmul.f32 1.0, %v345
        %v347 = vrcp.pop %v333
        %v348 = vmul.f32 1.0, %v347
        %v349 = vrcp.pop %v334
        %v350 = vmul.f32 1.0, %v349
        %v351 = vmul.f32 %v281, %v336
        %v352 = vmul.f32 %v283, %v338
        %v353 = vmul.f32 %v287, %v340
        %v354 = vmul.f32 %v289, %v342
        %v355 = vmul.f32 %v293, %v344
        %v356 = vmul.f32 %v295, %v346
        %v357 = vmul.f32 %v299, %v348
        %v358 = vmul.f32 %v301, %v350
        %359 = vst [vmem:[%s163] sm:$0xff] %v351
        %360 = vst [vmem:[%s163 + $0x8] sm:$0xff] %v352
        %361 = vst [vmem:[%s163 + $0x10] sm:$0xff] %v353
        %362 = vst [vmem:[%s163 + $0x18] sm:$0xff] %v354
        %363 = vst [vmem:[%s163 + $0x20] sm:$0xff] %v355
        %364 = vst [vmem:[%s163 + $0x28] sm:$0xff] %v356
        %365 = vst [vmem:[%s163 + $0x30] sm:$0xff] %v357
        %366 = vst [vmem:[%s163 + $0x38] sm:$0xff] %v358
        %s367 = sand.u32 %s93, 1
        %s368 = scalar_lea.sflag [#allocation3], %s367
        %s369 = sand.u32 %s93, 1
        %s370 = smul.addr %s369, 64
        %s371 = scalar_lea.vmem [#allocation2], %s370
        // Predicated region
        $region33: #{tpu_custom_call.1} parent=31 // pred_check
          %p372 = pneg %p103
        $region34: #{tpu_custom_call.1} parent=31 // pred_check_branch
          %374 = sbr.rel (%p372) target = $region36
        $region35: #{tpu_custom_call.1} parent=31 // pred_region
          %s376 = ssub.s32 1024, 1024
          %377 = vsyncadd %s368, %s376
          %s378 = smul.addr %s17, 8
          %s379 = smul.addr %s378, 128
          %s380 = scalar_lea.hbm %s3, %s379
          %s381 = sshll.u32 %s371, 4
          %s382 = int_to_ptr.vmem [resolvable:$true] %s381
          %387 = dma.vmem_to_hbm [thread:$0]  %s382, 1024, %s380, %s368, 256, 256, 16
        $region36: #{tpu_custom_call.1} parent=31 // pred_fallthru
          _
      $region32: #{tpu_custom_call.1} parent=5 // pred_fallthru
        _
      %p388 = scmp.le.s32.totalorder 2, %s12
      // Predicated region
      $region37: #{tpu_custom_call.1} parent=5 // pred_check
        %p389 = pneg %p388
      $region38: #{tpu_custom_call.1} parent=5 // pred_check_branch
        %391 = sbr.rel (%p389) target = $region40
      $region39: #{tpu_custom_call.1} parent=5 // pred_region
        %s392 = ssub.s32 %s12, 2
        // Predicated region
        $region41: #{tpu_custom_call.1} parent=39 // pred_check
          %p393 = pneg %p109
        $region42: #{tpu_custom_call.1} parent=39 // pred_check_branch
          %395 = sbr.rel (%p393) target = $region44
        $region43: #{tpu_custom_call.1} parent=39 // pred_region
          %s396 = sand.u32 %s94, 1
          %s397 = scalar_lea.sflag [#allocation3], %s396
          %s398 = sand.u32 %s94, 1
          %s399 = smul.addr %s398, 64
          %s400 = scalar_lea.vmem [#allocation2], %s399
          %401 = dma.done %s397, 1024
        $region44: #{tpu_custom_call.1} parent=39 // pred_fallthru
          _
      $region40: #{tpu_custom_call.1} parent=5 // pred_fallthru
        _
    $region6: #{tpu_custom_call.1} parent=1 // loop_footer
      %s16 = sadd.s32 1, %s12
    $region7: #{tpu_custom_call.1} parent=1 // loop_footer_branch
      %11 = sbr.rel target = $region3
    $region8: #{tpu_custom_call.1} parent=1 // loop_exit
      _
    %402 = vsyncpa [#allocation3], 1
    %s403 = scalar_lea.sflag [#allocation3], 1
    %404 = vsyncpa %s403, 1

</llo_original>
